<compile_context>
chip_gen: v6e
topology: v6e:2x2x1
jax: 0.10.0
libtpu: 0.0.40
codegen_flags: <defaults>
</compile_context>

<pallas_src>
import functools

import numpy as np

import jax
import jax.numpy as jnp
from jax.experimental import pallas as pl
from jax.experimental.pallas import tpu as pltpu

_EPS = 1e-5


def _layernorm(x, gamma, beta, eps):
    mean = jnp.mean(x, axis=-1, keepdims=True)
    var = jnp.mean((x - mean) ** 2, axis=-1, keepdims=True)
    return (x - mean) * jax.lax.rsqrt(var + eps) * gamma + beta


def encoder_kernel(eps, mm_dtype,
                   x_ref, sel_ref, attn_ref,
                   w1_ref, bf1_ref, w2_ref, slab_ref,
                   o_ref):
    """Row-tiled encoder-layer body.

    x_ref / o_ref : (1, tb, E) tile of one batch's rows (f32).
    sel_ref       : (tb, P) exact one-hot row->pattern selector (f32).
    attn_ref      : (1, P, E) this batch's fc_out(attention) rows, precomputed (f32).
    w1/w2         : FFN weights in mm_dtype (bf16 by default); bf1 and the slab
                    (g1, b1, g2, b2, bf2) stay f32.  LN/residual math is f32;
                    matmuls accumulate in f32 on the MXU.
    """
    x = x_ref[0]                                                      # (tb, E) f32

    # Exact (one-hot, f32-accumulate) selection of the precomputed attention rows.
    a = jnp.dot(sel_ref[...], attn_ref[0],
                preferred_element_type=jnp.float32)                   # (tb, E) f32

    g1, b1 = slab_ref[0:1, :], slab_ref[1:2, :]
    g2, b2 = slab_ref[2:3, :], slab_ref[3:4, :]
    bf2 = slab_ref[4:5, :]

    # Residual + LayerNorm 1 (dropout = identity in eval mode).
    x1 = _layernorm(x + a, g1, b1, eps)

    # FFN: Linear -> ReLU -> Linear (bf16 operands, f32 accumulation).
    h = jnp.dot(x1.astype(mm_dtype), w1_ref[...],
                preferred_element_type=jnp.float32) + bf1_ref[...]
    h = jnp.maximum(h, 0.0)
    ff = jnp.dot(h.astype(mm_dtype), w2_ref[...],
                 preferred_element_type=jnp.float32) + bf2

    # Residual + LayerNorm 2.
    o_ref[0] = _layernorm(x1 + ff, g2, b2, eps).astype(o_ref.dtype)


def _attention_row_patterns(T, E, num_heads):
    """Static (numpy) analysis of torch's `.reshape(N, T, E)` of the (N,H,T,hd) tensor.

    Since out[n,h,t,:] == colsum_V[n,h,:] for every t (softmax rows sum to 1 and the
    reference einsum reduces k and v independently), row t of the reshaped output is a
    fixed gather of the per-head V column-sums that depends only on static shapes.
    Returns:
      col : (P, E) int32 gather indices into the flat (E,) per-batch V column-sum.
      sel : (T, P) f32 one-hot row -> pattern selection matrix.
    P == num_heads whenever num_heads divides T; P <= T in general.
    """
    hd = E // num_heads
    flat = np.arange(T)[:, None] * E + np.arange(E)[None, :]          # flat idx in (H,T,hd)
    head = flat // (T * hd)                                           # (T, E) head per slot
    uniq, inverse = np.unique(head, axis=0, return_inverse=True)
    inverse = np.asarray(inverse).reshape(-1)
    col = (uniq * hd + (np.arange(E)[None, :] % hd)).astype(np.int32)  # (P, E)
    sel = np.zeros((T, uniq.shape[0]), np.float32)
    sel[np.arange(T), inverse] = 1.0
    return col, sel


def _pick_t_block(T, E, Hff, max_tb=512, budget_bytes=8 << 20):
    """Largest 8-aligned sequence tile <= 512 keeping f32 live rows under ~8 MiB."""
    per_row = (4 * E + Hff) * 4
    tb = min(max_tb, max(8, budget_bytes // per_row))
    tb = max(8, (tb // 8) * 8)
    t_ceil = ((T + 7) // 8) * 8
    return min(tb, t_ceil)


def _vmem_limit_bytes(tb, E, Hff, P, mm_bytes):
    """Derive a VMEM limit from tile/weight sizes instead of a hard-coded constant."""
    f32 = 4
    stream = 2 * (2 * tb * E * f32 + tb * P * f32)          # x, out, sel (double-buffered)
    weights = 2 * ((E * Hff + Hff * E) * mm_bytes           # w1, w2 (assume 2 buffers)
                   + (P * E + 8 * E + 8 * Hff) * f32)       # attn table, slab, bf1 (padded)
    work = tb * (Hff + 4 * E) * f32                         # h / x1 / ff live values
    need = stream + weights + work + (4 << 20)              # + compiler scratch headroom
    limit = max(32 << 20, min(2 * need, 100 << 20))
    try:
        limit = min(limit, int(pltpu.get_tpu_info().vmem_capacity_bytes * 0.9))
    except Exception:
        pass
    return int(limit)


def transformer_encoder_layer(x, params, num_heads, *, matmul_dtype=jnp.bfloat16):
    """x: (N, T, E) float32.  params: dict of weights (see init_params)."""
    N, T, E = x.shape
    Hff = params["w1"].shape[1]
    eps = _EPS
    mm_dtype = jnp.dtype(matmul_dtype)

    # ---- Degenerate-attention pre-pass (tiny; only the V third of qkv is projected). ----
    col, sel_np = _attention_row_patterns(T, E, num_heads)
    P = col.shape[0]
    wv, bv = params["wqkv"][:, 2 * E:], params["bqkv"][:, 2 * E:]
    v_colsum = jnp.sum(x, axis=1) @ wv + T * bv[0]                     # (N, E) per-head colsum of V
    a_uniq = v_colsum[:, jnp.asarray(col)]                             # (N, P, E) unique attn rows
    attn_rows = a_uniq @ params["wout"] + params["bout"][0]            # (N, P, E) fc_out applied once

    # ---- Tiling: grid over (batch, seq-tile); pad T up to a multiple of the row block. ----
    tb = _pick_t_block(T, E, Hff)
    T_pad = ((T + tb - 1) // tb) * tb
    x_p = jnp.pad(x, ((0, 0), (0, T_pad - T), (0, 0))) if T_pad != T else x
    sel_pad = np.zeros((T_pad, P), np.float32)
    sel_pad[:T] = sel_np
    sel = jnp.asarray(sel_pad)

    w1 = params["w1"].astype(mm_dtype)
    w2 = params["w2"].astype(mm_dtype)
    bf1 = params["bf1"]
    slab = jnp.concatenate(
        [params["g1"], params["beta1"], params["g2"], params["beta2"], params["bf2"],
         jnp.zeros((3, E), jnp.float32)], axis=0)                      # (8, E) packed LN/bias slab

    grid = (N, T_pad // tb)

    in_specs = [
        pl.BlockSpec((1, tb, E), lambda n, j: (n, j, 0)),              # x rows
        pl.BlockSpec((tb, P), lambda n, j: (j, 0)),                    # one-hot pattern selector
        pl.BlockSpec((1, P, E), lambda n, j: (n, 0, 0)),               # per-batch attention rows
        pl.BlockSpec((E, Hff), lambda n, j: (0, 0)),                   # w1 (mm_dtype)
        pl.BlockSpec((1, Hff), lambda n, j: (0, 0)),                   # bf1
        pl.BlockSpec((Hff, E), lambda n, j: (0, 0)),                   # w2 (mm_dtype)
        pl.BlockSpec((8, E), lambda n, j: (0, 0)),                     # LN gammas/betas + bf2
    ]
    out_spec = pl.BlockSpec((1, tb, E), lambda n, j: (n, j, 0))

    rows = N * T_pad
    flops = rows * (4 * E * Hff + 2 * P * E + 10 * E)
    bytes_accessed = (8 * rows * E + 4 * rows * P
                      + 2 * E * Hff * mm_dtype.itemsize
                      + 4 * (N * P * E + 8 * E + Hff))
    cost = pl.CostEstimate(flops=int(flops), transcendentals=int(2 * rows),
                           bytes_accessed=int(bytes_accessed))

    kernel = functools.partial(encoder_kernel, eps, mm_dtype)
    out = pl.pallas_call(
        kernel,
        out_shape=jax.ShapeDtypeStruct((N, T_pad, E), x.dtype),
        grid=grid,
        in_specs=in_specs,
        out_specs=out_spec,
        compiler_params=pltpu.CompilerParams(
            dimension_semantics=("parallel", "parallel"),
            vmem_limit_bytes=_vmem_limit_bytes(tb, E, Hff, P, mm_dtype.itemsize)),
        cost_estimate=cost,
    )(x_p, sel, attn_rows, w1, bf1, w2, slab)

    return out[:, :T, :] if T_pad != T else out


def init_params(key, embed_dim, num_heads, forward_expansion=4):
    """Deterministic synthetic parameters (shapes match the PyTorch module).
    Linear weights are stored pre-transposed as (in_features, out_features)."""
    E = embed_dim
    Hff = forward_expansion * E
    ks = jax.random.split(key, 8)

    def lin(k, fan_in, fan_out):
        bound = 1.0 / (fan_in ** 0.5)
        kw, kb = jax.random.split(k)
        w = jax.random.uniform(kw, (fan_in, fan_out), jnp.float32, -bound, bound)
        b = jax.random.uniform(kb, (1, fan_out), jnp.float32, -bound, bound)
        return w, b

    wqkv, bqkv = lin(ks[0], E, 3 * E)     # qkv:    Linear(E, 3E)
    wout, bout = lin(ks[1], E, E)         # fc_out: Linear(E, E)
    w1, bf1 = lin(ks[2], E, Hff)          # ff[0]:  Linear(E, 4E)
    w2, bf2 = lin(ks[3], Hff, E)          # ff[2]:  Linear(4E, E)

    return {
        "wqkv": wqkv, "bqkv": bqkv,
        "wout": wout, "bout": bout,
        "g1": jnp.ones((1, E), jnp.float32), "beta1": jnp.zeros((1, E), jnp.float32),
        "w1": w1, "bf1": bf1,
        "w2": w2, "bf2": bf2,
        "g2": jnp.ones((1, E), jnp.float32), "beta2": jnp.zeros((1, E), jnp.float32),
    }


def reference_forward(x, params, num_heads):
    """Pure-JAX replica of the PyTorch forward (eval mode), including the full
    QK^T / softmax path and the exact `.reshape(N, T, E)` (no permute)."""
    N, T, E = x.shape
    hd = E // num_heads

    qkv = x @ params["wqkv"] + params["bqkv"][0]                       # (N, T, 3E)
    qkv = qkv.reshape(N, T, 3, num_heads, hd).transpose(2, 0, 3, 1, 4)
    q, k, v = qkv[0], qkv[1], qkv[2]                                   # (N, h, T, hd)
    attn = jnp.einsum("nhqd,nhkd->nhqk", q, k) / (hd ** 0.5)
    attn = jax.nn.softmax(attn, axis=-1)
    out = jnp.einsum("nhqk,nhvd->nhqd", attn, v)                       # k and v both reduced
    out = out.reshape(N, T, E)                                         # torch: reshape, no permute
    attn_out = out @ params["wout"] + params["bout"][0]

    def ln(y, g, b):
        m = jnp.mean(y, -1, keepdims=True)
        var = jnp.mean((y - m) ** 2, -1, keepdims=True)
        return (y - m) / jnp.sqrt(var + _EPS) * g[0] + b[0]

    x1 = ln(x + attn_out, params["g1"], params["beta1"])
    ff = jnp.maximum(x1 @ params["w1"] + params["bf1"][0], 0.0) @ params["w2"] + params["bf2"][0]
    return ln(x1 + ff, params["g2"], params["beta2"])


if __name__ == "__main__":
    N, T, E, num_heads = 2, 8, 32, 4      # seq=8, embed=32, heads=4 (head_dim=8)
    key = jax.random.PRNGKey(0)
    kx, kp = jax.random.split(key)

    x = jax.random.normal(kx, (N, T, E), jnp.float32)
    params = init_params(kp, E, num_heads)
    ref = reference_forward(x, params, num_heads)

    # f32-matmul path: exact parity with the f32 reference at tight tolerance.
    out_f32 = jax.block_until_ready(
        transformer_encoder_layer(x, params, num_heads, matmul_dtype=jnp.float32))
    assert out_f32.shape == (N, T, E)
    assert jnp.allclose(out_f32, ref, atol=1e-4, rtol=1e-4), (
        f"f32 max abs err = {float(jnp.max(jnp.abs(out_f32 - ref)))}")

    # bf16-matmul path (default / production config): operands rounded to bf16,
    # f32 accumulation -> looser tolerance against the f32 reference.
    out_bf16 = jax.block_until_ready(transformer_encoder_layer(x, params, num_heads))
    assert out_bf16.shape == (N, T, E)
    assert jnp.allclose(out_bf16, ref, atol=5e-2, rtol=5e-2), (
        f"bf16 max abs err = {float(jnp.max(jnp.abs(out_bf16 - ref)))}")

    print("KERNEL_OK")
</pallas_src>

<mosaic_0001>
module attributes {stable_mosaic.version = 11 : i64} {
  func.func @encoder_kernel(%arg0: i32, %arg1: i32, %arg2: memref<1x8x32xf32, #tpu.memory_space<vmem>>, %arg3: memref<8x4xf32, #tpu.memory_space<vmem>>, %arg4: memref<1x4x32xf32, #tpu.memory_space<vmem>>, %arg5: memref<32x128xf32, #tpu.memory_space<vmem>>, %arg6: memref<1x128xf32, #tpu.memory_space<vmem>>, %arg7: memref<128x32xf32, #tpu.memory_space<vmem>>, %arg8: memref<8x32xf32, #tpu.memory_space<vmem>>, %arg9: memref<1x8x32xf32, #tpu.memory_space<vmem>>) attributes {dimension_semantics = [#tpu.dimension_semantics<parallel>, #tpu.dimension_semantics<parallel>], iteration_bounds = array<i64: 2, 1>, scalar_prefetch = 0 : i64, scratch_operands = 0 : i64, tpu.core_type = #tpu.core_type<tc>, window_params = [{transform_indices = @transform_0, window_bounds = array<i64: 1, 8, 32>}, {transform_indices = @transform_1, window_bounds = array<i64: 8, 4>}, {transform_indices = @transform_2, window_bounds = array<i64: 1, 4, 32>}, {pipeline_mode = #tpu.pipeline_mode<synchronous>, transform_indices = @transform_3, window_bounds = array<i64: 32, 128>}, {pipeline_mode = #tpu.pipeline_mode<synchronous>, transform_indices = @transform_4, window_bounds = array<i64: 1, 128>}, {pipeline_mode = #tpu.pipeline_mode<synchronous>, transform_indices = @transform_5, window_bounds = array<i64: 128, 32>}, {pipeline_mode = #tpu.pipeline_mode<synchronous>, transform_indices = @transform_6, window_bounds = array<i64: 8, 32>}, {transform_indices = @transform_7, window_bounds = array<i64: 1, 8, 32>}]} {
    %c0 = arith.constant 0 : index
    %c0_0 = arith.constant 0 : index
    %c0_1 = arith.constant 0 : index
    %0 = vector.load %arg2[%c0, %c0_0, %c0_1] : memref<1x8x32xf32, #tpu.memory_space<vmem>>, vector<1x8x32xf32>
    %1 = vector.shape_cast %0 : vector<1x8x32xf32> to vector<8x32xf32>
    %c0_2 = arith.constant 0 : index
    %c0_3 = arith.constant 0 : index
    %2 = vector.load %arg3[%c0_2, %c0_3] : memref<8x4xf32, #tpu.memory_space<vmem>>, vector<8x4xf32>
    %c0_4 = arith.constant 0 : index
    %c0_5 = arith.constant 0 : index
    %c0_6 = arith.constant 0 : index
    %3 = vector.load %arg4[%c0_4, %c0_5, %c0_6] : memref<1x4x32xf32, #tpu.memory_space<vmem>>, vector<1x4x32xf32>
    %4 = vector.shape_cast %3 : vector<1x4x32xf32> to vector<4x32xf32>
    %cst = arith.constant dense<0.000000e+00> : vector<8x32xf32>
    %5 = tpu.matmul %2, %4, %cst {dimension_numbers = #tpu.dot_dimension_numbers<[1], [0], [0], [1], [0, 0, 1, 1], [], []>} : vector<8x4xf32>, vector<4x32xf32>, vector<8x32xf32> -> vector<8x32xf32>
    %c0_7 = arith.constant 0 : index
    %c0_8 = arith.constant 0 : index
    %6 = vector.load %arg8[%c0_7, %c0_8] : memref<8x32xf32, #tpu.memory_space<vmem>>, vector<1x32xf32>
    %c1 = arith.constant 1 : index
    %c0_9 = arith.constant 0 : index
    %7 = vector.load %arg8[%c1, %c0_9] : memref<8x32xf32, #tpu.memory_space<vmem>>, vector<1x32xf32>
    %c2 = arith.constant 2 : index
    %c0_10 = arith.constant 0 : index
    %8 = vector.load %arg8[%c2, %c0_10] : memref<8x32xf32, #tpu.memory_space<vmem>>, vector<1x32xf32>
    %c3 = arith.constant 3 : index
    %c0_11 = arith.constant 0 : index
    %9 = vector.load %arg8[%c3, %c0_11] : memref<8x32xf32, #tpu.memory_space<vmem>>, vector<1x32xf32>
    %c4 = arith.constant 4 : index
    %c0_12 = arith.constant 0 : index
    %10 = vector.load %arg8[%c4, %c0_12] : memref<8x32xf32, #tpu.memory_space<vmem>>, vector<1x32xf32>
    %11 = arith.addf %1, %5 : vector<8x32xf32>
    %cst_13 = arith.constant dense<0.000000e+00> : vector<8xf32>
    %12 = vector.multi_reduction <add>, %11, %cst_13 [1] : vector<8x32xf32> to vector<8xf32>
    %13 = vector.shape_cast %12 : vector<8xf32> to vector<8x1xf32>
    %cst_14 = arith.constant 3.200000e+01 : f32
    %14 = vector.broadcast %cst_14 : f32 to vector<8x1xf32>
    %15 = arith.divf %13, %14 : vector<8x1xf32>
    %16 = vector.broadcast %15 : vector<8x1xf32> to vector<8x32xf32>
    %17 = arith.subf %11, %16 : vector<8x32xf32>
    %18 = arith.mulf %17, %17 : vector<8x32xf32>
    %cst_15 = arith.constant dense<0.000000e+00> : vector<8xf32>
    %19 = vector.multi_reduction <add>, %18, %cst_15 [1] : vector<8x32xf32> to vector<8xf32>
    %20 = vector.shape_cast %19 : vector<8xf32> to vector<8x1xf32>
    %cst_16 = arith.constant 3.200000e+01 : f32
    %21 = vector.broadcast %cst_16 : f32 to vector<8x1xf32>
    %22 = arith.divf %20, %21 : vector<8x1xf32>
    %23 = vector.broadcast %15 : vector<8x1xf32> to vector<8x32xf32>
    %24 = arith.subf %11, %23 : vector<8x32xf32>
    %cst_17 = arith.constant 9.99999974E-6 : f32
    %25 = vector.broadcast %cst_17 : f32 to vector<8x1xf32>
    %26 = arith.addf %22, %25 : vector<8x1xf32>
    %27 = math.rsqrt %26 : vector<8x1xf32>
    %28 = vector.broadcast %27 : vector<8x1xf32> to vector<8x32xf32>
    %29 = arith.mulf %24, %28 : vector<8x32xf32>
    %30 = vector.broadcast %6 : vector<1x32xf32> to vector<8x32xf32>
    %31 = arith.mulf %29, %30 : vector<8x32xf32>
    %32 = vector.broadcast %7 : vector<1x32xf32> to vector<8x32xf32>
    %33 = arith.addf %31, %32 : vector<8x32xf32>
    %c0_18 = arith.constant 0 : index
    %c0_19 = arith.constant 0 : index
    %34 = vector.load %arg5[%c0_18, %c0_19] : memref<32x128xf32, #tpu.memory_space<vmem>>, vector<32x128xf32>
    %cst_20 = arith.constant dense<0.000000e+00> : vector<8x128xf32>
    %35 = tpu.matmul %33, %34, %cst_20 {dimension_numbers = #tpu.dot_dimension_numbers<[1], [0], [0], [1], [0, 0, 1, 1], [], []>} : vector<8x32xf32>, vector<32x128xf32>, vector<8x128xf32> -> vector<8x128xf32>
    %c0_21 = arith.constant 0 : index
    %c0_22 = arith.constant 0 : index
    %36 = vector.load %arg6[%c0_21, %c0_22] : memref<1x128xf32, #tpu.memory_space<vmem>>, vector<1x128xf32>
    %37 = vector.broadcast %36 : vector<1x128xf32> to vector<8x128xf32>
    %38 = arith.addf %35, %37 : vector<8x128xf32>
    %cst_23 = arith.constant 0.000000e+00 : f32
    %39 = vector.broadcast %cst_23 : f32 to vector<8x128xf32>
    %40 = arith.maximumf %38, %39 : vector<8x128xf32>
    %c0_24 = arith.constant 0 : index
    %c0_25 = arith.constant 0 : index
    %41 = vector.load %arg7[%c0_24, %c0_25] : memref<128x32xf32, #tpu.memory_space<vmem>>, vector<128x32xf32>
    %cst_26 = arith.constant dense<0.000000e+00> : vector<8x32xf32>
    %42 = tpu.matmul %40, %41, %cst_26 {dimension_numbers = #tpu.dot_dimension_numbers<[1], [0], [0], [1], [0, 0, 1, 1], [], []>} : vector<8x128xf32>, vector<128x32xf32>, vector<8x32xf32> -> vector<8x32xf32>
    %43 = vector.broadcast %10 : vector<1x32xf32> to vector<8x32xf32>
    %44 = arith.addf %42, %43 : vector<8x32xf32>
    %45 = arith.addf %33, %44 : vector<8x32xf32>
    %cst_27 = arith.constant dense<0.000000e+00> : vector<8xf32>
    %46 = vector.multi_reduction <add>, %45, %cst_27 [1] : vector<8x32xf32> to vector<8xf32>
    %47 = vector.shape_cast %46 : vector<8xf32> to vector<8x1xf32>
    %cst_28 = arith.constant 3.200000e+01 : f32
    %48 = vector.broadcast %cst_28 : f32 to vector<8x1xf32>
    %49 = arith.divf %47, %48 : vector<8x1xf32>
    %50 = vector.broadcast %49 : vector<8x1xf32> to vector<8x32xf32>
    %51 = arith.subf %45, %50 : vector<8x32xf32>
    %52 = arith.mulf %51, %51 : vector<8x32xf32>
    %cst_29 = arith.constant dense<0.000000e+00> : vector<8xf32>
    %53 = vector.multi_reduction <add>, %52, %cst_29 [1] : vector<8x32xf32> to vector<8xf32>
    %54 = vector.shape_cast %53 : vector<8xf32> to vector<8x1xf32>
    %cst_30 = arith.constant 3.200000e+01 : f32
    %55 = vector.broadcast %cst_30 : f32 to vector<8x1xf32>
    %56 = arith.divf %54, %55 : vector<8x1xf32>
    %57 = vector.broadcast %49 : vector<8x1xf32> to vector<8x32xf32>
    %58 = arith.subf %45, %57 : vector<8x32xf32>
    %cst_31 = arith.constant 9.99999974E-6 : f32
    %59 = vector.broadcast %cst_31 : f32 to vector<8x1xf32>
    %60 = arith.addf %56, %59 : vector<8x1xf32>
    %61 = math.rsqrt %60 : vector<8x1xf32>
    %62 = vector.broadcast %61 : vector<8x1xf32> to vector<8x32xf32>
    %63 = arith.mulf %58, %62 : vector<8x32xf32>
    %64 = vector.broadcast %8 : vector<1x32xf32> to vector<8x32xf32>
    %65 = arith.mulf %63, %64 : vector<8x32xf32>
    %66 = vector.broadcast %9 : vector<1x32xf32> to vector<8x32xf32>
    %67 = arith.addf %65, %66 : vector<8x32xf32>
    %c0_32 = arith.constant 0 : index
    %c0_33 = arith.constant 0 : index
    %c0_34 = arith.constant 0 : index
    %68 = vector.load %arg9[%c0_32, %c0_33, %c0_34] : memref<1x8x32xf32, #tpu.memory_space<vmem>>, vector<1x8x32xf32>
    %69 = vector.shape_cast %68 : vector<1x8x32xf32> to vector<8x32xf32>
    %70 = vector.shape_cast %67 : vector<8x32xf32> to vector<1x8x32xf32>
    tpu.vector_store %arg9[%c0_32, %c0_33, %c0_34], %70 {strides = array<i32>} : memref<1x8x32xf32, #tpu.memory_space<vmem>>, vector<1x8x32xf32>,
    return
  }
  func.func @transform_0(%arg0: i32, %arg1: i32) -> (i32, i32, i32) {
    %c0_i32 = arith.constant 0 : i32
    %c0_i32_0 = arith.constant 0 : i32
    return %arg0, %arg1, %c0_i32 : i32, i32, i32
  }
  func.func @transform_1(%arg0: i32, %arg1: i32) -> (i32, i32) {
    %c0_i32 = arith.constant 0 : i32
    %c0_i32_0 = arith.constant 0 : i32
    return %arg1, %c0_i32 : i32, i32
  }
  func.func @transform_2(%arg0: i32, %arg1: i32) -> (i32, i32, i32) {
    %c0_i32 = arith.constant 0 : i32
    %c0_i32_0 = arith.constant 0 : i32
    %c0_i32_1 = arith.constant 0 : i32
    return %arg0, %c0_i32, %c0_i32_0 : i32, i32, i32
  }
  func.func @transform_3(%arg0: i32, %arg1: i32) -> (i32, i32) {
    %c0_i32 = arith.constant 0 : i32
    %c0_i32_0 = arith.constant 0 : i32
    %c0_i32_1 = arith.constant 0 : i32
    return %c0_i32, %c0_i32_0 : i32, i32
  }
  func.func @transform_4(%arg0: i32, %arg1: i32) -> (i32, i32) {
    %c0_i32 = arith.constant 0 : i32
    %c0_i32_0 = arith.constant 0 : i32
    %c0_i32_1 = arith.constant 0 : i32
    return %c0_i32, %c0_i32_0 : i32, i32
  }
  func.func @transform_5(%arg0: i32, %arg1: i32) -> (i32, i32) {
    %c0_i32 = arith.constant 0 : i32
    %c0_i32_0 = arith.constant 0 : i32
    %c0_i32_1 = arith.constant 0 : i32
    return %c0_i32, %c0_i32_0 : i32, i32
  }
  func.func @transform_6(%arg0: i32, %arg1: i32) -> (i32, i32) {
    %c0_i32 = arith.constant 0 : i32
    %c0_i32_0 = arith.constant 0 : i32
    %c0_i32_1 = arith.constant 0 : i32
    return %c0_i32, %c0_i32_0 : i32, i32
  }
  func.func @transform_7(%arg0: i32, %arg1: i32) -> (i32, i32, i32) {
    %c0_i32 = arith.constant 0 : i32
    %c0_i32_0 = arith.constant 0 : i32
    return %arg0, %arg1, %c0_i32 : i32, i32, i32
  }
}

</mosaic_0001>

<llo_original>
// kernel: tpu_custom_call.1
$region0: #{tpu_custom_call.1}
  #allocation0 [shape = 'u32[]', space=smem, size = 0x4, offset = 0x4, fixed_abs, tag = 'smem constant byte address 0x4 - core index']
  #allocation1 [shape = 'u32[144,128]{1,0:T(1,128)}', space=vmem, size = 0x12000, scoped, tag = 'internal scratch']
  %s0 = inlined_call_operand.vmem [shape: f32[2,8,32], index: 0, kind: input, shape index: {}]
  %s1 = inlined_call_operand.vmem [shape: f32[8,4], index: 1, kind: input, shape index: {}]
  %s2 = inlined_call_operand.vmem [shape: f32[2,4,32], index: 2, kind: input, shape index: {}]
  %s3 = inlined_call_operand.vmem [shape: f32[32,128], index: 3, kind: input, shape index: {}]
  %s4 = inlined_call_operand.vmem [shape: f32[1,128], index: 4, kind: input, shape index: {}]
  %s5 = inlined_call_operand.vmem [shape: f32[128,32], index: 5, kind: input, shape index: {}]
  %s6 = inlined_call_operand.vmem [shape: f32[8,32], index: 6, kind: input, shape index: {}]
  %s7 = inlined_call_operand.hbm [shape: f32[2,8,32], index: 7, kind: output, shape index: {}]
  %s8 = sld [smem:[#allocation0]]
  $region61: #{tpu_custom_call.1} parent=0
    _
  %s10 = ssub.s32 1, %s8
  %s11 = scalar_select 0, %s10, %s8
  $region1: #{tpu_custom_call.1} parent=0
    #allocation2 [shape = 'u8[8192]{0}', space=vmem, size = 0x2000, scoped, tag = 'output window, operand 0']
    #allocation3 [shape = 's32[2]{0}', space=sflag, size = 0x8, scoped, tag = 'scoped memory for tpu_custom_call.1']
    %12 = vsyncpa [#allocation3], 0
    %s13 = scalar_lea.sflag [#allocation3], 1
    %14 = vsyncpa %s13, 0
    loop: start=0, step=1, limit=4
    $region2: #{tpu_custom_call.1} parent=1 // loop_pre_header
      _
    $region3: #{tpu_custom_call.1} parent=1 // loop_header
      %s16 = sphi 0, %s20
      %p17 = scmp.ge.s32.totalorder %s16, 4
      %s23 = sphi 0, %s35
      %s24 = sphi 0, %s31
      %s25 = sphi 0, %s23
      %s26 = sphi 0, %s24
      %s27 = sphi 0, %s25
      %s28 = sphi 0, %s26
      %s40 = sphi 0, %s42
      %s43 = sphi 0, %s40
      %s44 = sphi 0, %s43
      %s60 = sphi 0, %s44
      %s66 = sphi 0, %s68
      %s69 = sphi 0, %s66
      %s70 = sphi 0, %s69
      %s86 = sphi 0, %s70
      %s92 = sphi 0, %s94
      %s95 = sphi 0, %s92
      %s96 = sphi 0, %s95
      %s112 = sphi 0, %s96
      %s116 = sphi 0, %s116
      %s118 = sphi 0, %s116
      %s119 = sphi 0, %s118
      %s133 = sphi 0, %s119
      %s137 = sphi 0, %s137
      %s139 = sphi 0, %s137
      %s140 = sphi 0, %s139
      %s154 = sphi 0, %s140
      %s158 = sphi 0, %s158
      %s160 = sphi 0, %s158
      %s161 = sphi 0, %s160
      %s175 = sphi 0, %s161
      %s179 = sphi 0, %s179
      %s181 = sphi 0, %s179
      %s182 = sphi 0, %s181
      %s196 = sphi 0, %s182
      %s204 = sphi 0, %s206
      %s207 = sphi 0, %s204
      %s208 = sphi 0, %s207
      %s224 = sphi 0, %s208
    $region4: #{tpu_custom_call.1} parent=1 // loop_header_branch
      %19 = sbr.rel (%p17) target = $region8
    $region5: #{tpu_custom_call.1} parent=1 // loop_body
      %s21 = ssub.s32 %s16, 1
      %s22 = ssub.s32 %s16, 2
      %s29 = sadd.s32 1, %s24
      %p30 = scmp.ge.s32.totalorder %s29, 1
      %s31 = scalar_select %p30, 0, %s29
      %s32 = sadd.s32 1, %s23
      %s33 = scalar_select %p30, %s32, %s23
      %p34 = scmp.ge.s32.totalorder %s33, 2
      %s35 = scalar_select %p34, 0, %s33
      %s36 = ssub.s32 %s23, %s35
      %s37 = ssub.s32 %s24, %s31
      %s38 = sor.u32 %s36, %s37
      %p39 = scmp.eq.s32.totalorder %s38, 0
      %s41 = sadd.s32 %s40, 1
      %s42 = scalar_select %p39, %s40, %s41
      %p45 = pneg %p39
      %p46 = scmp.eq.s32.totalorder %s16, 1
      %p47 = por %p45, %p46
      %p48 = scmp.ne.s32.totalorder %s40, %s43
      %p49 = scmp.eq.s32.totalorder %s16, 0
      %p50 = por %p48, %p49
      %p51 = scmp.ne.s32.totalorder %s40, %s43
      %p52 = scmp.eq.s32.totalorder %s21, 1
      %p53 = por %p51, %p52
      %p54 = scmp.ne.s32.totalorder %s43, %s44
      %p55 = scmp.eq.s32.totalorder %s21, 0
      %p56 = por %p54, %p55
      %p57 = scmp.ne.s32.totalorder %s43, %s44
      %p58 = scmp.eq.s32.totalorder %s22, 1
      %p59 = por %p57, %p58
      %p61 = scmp.ne.s32.totalorder %s44, %s60
      %p62 = scmp.eq.s32.totalorder %s22, 0
      %p63 = por %p61, %p62
      %s64 = ssub.s32 %s24, %s31
      %p65 = scmp.eq.s32.totalorder %s64, 0
      %s67 = sadd.s32 %s66, 1
      %s68 = scalar_select %p65, %s66, %s67
      %p71 = pneg %p65
      %p72 = scmp.eq.s32.totalorder %s16, 1
      %p73 = por %p71, %p72
      %p74 = scmp.ne.s32.totalorder %s66, %s69
      %p75 = scmp.eq.s32.totalorder %s16, 0
      %p76 = por %p74, %p75
      %p77 = scmp.ne.s32.totalorder %s66, %s69
      %p78 = scmp.eq.s32.totalorder %s21, 1
      %p79 = por %p77, %p78
      %p80 = scmp.ne.s32.totalorder %s69, %s70
      %p81 = scmp.eq.s32.totalorder %s21, 0
      %p82 = por %p80, %p81
      %p83 = scmp.ne.s32.totalorder %s69, %s70
      %p84 = scmp.eq.s32.totalorder %s22, 1
      %p85 = por %p83, %p84
      %p87 = scmp.ne.s32.totalorder %s70, %s86
      %p88 = scmp.eq.s32.totalorder %s22, 0
      %p89 = por %p87, %p88
      %s90 = ssub.s32 %s23, %s35
      %p91 = scmp.eq.s32.totalorder %s90, 0
      %s93 = sadd.s32 %s92, 1
      %s94 = scalar_select %p91, %s92, %s93
      %p97 = pneg %p91
      %p98 = scmp.eq.s32.totalorder %s16, 1
      %p99 = por %p97, %p98
      %p100 = scmp.ne.s32.totalorder %s92, %s95
      %p101 = scmp.eq.s32.totalorder %s16, 0
      %p102 = por %p100, %p101
      %p103 = scmp.ne.s32.totalorder %s92, %s95
      %p104 = scmp.eq.s32.totalorder %s21, 1
      %p105 = por %p103, %p104
      %p106 = scmp.ne.s32.totalorder %s95, %s96
      %p107 = scmp.eq.s32.totalorder %s21, 0
      %p108 = por %p106, %p107
      %p109 = scmp.ne.s32.totalorder %s95, %s96
      %p110 = scmp.eq.s32.totalorder %s22, 1
      %p111 = por %p109, %p110
      %p113 = scmp.ne.s32.totalorder %s96, %s112
      %p114 = scmp.eq.s32.totalorder %s22, 0
      %p115 = por %p113, %p114
      %s117 = sadd.s32 %s116, 1
      %p120 = scmp.eq.s32.totalorder %s16, 1
      %p121 = scmp.ne.s32.totalorder %s116, %s118
      %p122 = scmp.eq.s32.totalorder %s16, 0
      %p123 = por %p121, %p122
      %p124 = scmp.ne.s32.totalorder %s116, %s118
      %p125 = scmp.eq.s32.totalorder %s21, 1
      %p126 = por %p124, %p125
      %p127 = scmp.ne.s32.totalorder %s118, %s119
      %p128 = scmp.eq.s32.totalorder %s21, 0
      %p129 = por %p127, %p128
      %p130 = scmp.ne.s32.totalorder %s118, %s119
      %p131 = scmp.eq.s32.totalorder %s22, 1
      %p132 = por %p130, %p131
      %p134 = scmp.ne.s32.totalorder %s119, %s133
      %p135 = scmp.eq.s32.totalorder %s22, 0
      %p136 = por %p134, %p135
      %s138 = sadd.s32 %s137, 1
      %p141 = scmp.eq.s32.totalorder %s16, 1
      %p142 = scmp.ne.s32.totalorder %s137, %s139
      %p143 = scmp.eq.s32.totalorder %s16, 0
      %p144 = por %p142, %p143
      %p145 = scmp.ne.s32.totalorder %s137, %s139
      %p146 = scmp.eq.s32.totalorder %s21, 1
      %p147 = por %p145, %p146
      %p148 = scmp.ne.s32.totalorder %s139, %s140
      %p149 = scmp.eq.s32.totalorder %s21, 0
      %p150 = por %p148, %p149
      %p151 = scmp.ne.s32.totalorder %s139, %s140
      %p152 = scmp.eq.s32.totalorder %s22, 1
      %p153 = por %p151, %p152
      %p155 = scmp.ne.s32.totalorder %s140, %s154
      %p156 = scmp.eq.s32.totalorder %s22, 0
      %p157 = por %p155, %p156
      %s159 = sadd.s32 %s158, 1
      %p162 = scmp.eq.s32.totalorder %s16, 1
      %p163 = scmp.ne.s32.totalorder %s158, %s160
      %p164 = scmp.eq.s32.totalorder %s16, 0
      %p165 = por %p163, %p164
      %p166 = scmp.ne.s32.totalorder %s158, %s160
      %p167 = scmp.eq.s32.totalorder %s21, 1
      %p168 = por %p166, %p167
      %p169 = scmp.ne.s32.totalorder %s160, %s161
      %p170 = scmp.eq.s32.totalorder %s21, 0
      %p171 = por %p169, %p170
      %p172 = scmp.ne.s32.totalorder %s160, %s161
      %p173 = scmp.eq.s32.totalorder %s22, 1
      %p174 = por %p172, %p173
      %p176 = scmp.ne.s32.totalorder %s161, %s175
      %p177 = scmp.eq.s32.totalorder %s22, 0
      %p178 = por %p176, %p177
      %s180 = sadd.s32 %s179, 1
      %p183 = scmp.eq.s32.totalorder %s16, 1
      %p184 = scmp.ne.s32.totalorder %s179, %s181
      %p185 = scmp.eq.s32.totalorder %s16, 0
      %p186 = por %p184, %p185
      %p187 = scmp.ne.s32.totalorder %s179, %s181
      %p188 = scmp.eq.s32.totalorder %s21, 1
      %p189 = por %p187, %p188
      %p190 = scmp.ne.s32.totalorder %s181, %s182
      %p191 = scmp.eq.s32.totalorder %s21, 0
      %p192 = por %p190, %p191
      %p193 = scmp.ne.s32.totalorder %s181, %s182
      %p194 = scmp.eq.s32.totalorder %s22, 1
      %p195 = por %p193, %p194
      %p197 = scmp.ne.s32.totalorder %s182, %s196
      %p198 = scmp.eq.s32.totalorder %s22, 0
      %p199 = por %p197, %p198
      %s200 = ssub.s32 %s23, %s35
      %s201 = ssub.s32 %s24, %s31
      %s202 = sor.u32 %s200, %s201
      %p203 = scmp.eq.s32.totalorder %s202, 0
      %s205 = sadd.s32 %s204, 1
      %s206 = scalar_select %p203, %s204, %s205
      %p209 = pneg %p203
      %p210 = scmp.eq.s32.totalorder %s16, 1
      %p211 = por %p209, %p210
      %p212 = scmp.ne.s32.totalorder %s204, %s207
      %p213 = scmp.eq.s32.totalorder %s16, 0
      %p214 = por %p212, %p213
      %p215 = scmp.ne.s32.totalorder %s204, %s207
      %p216 = scmp.eq.s32.totalorder %s21, 1
      %p217 = por %p215, %p216
      %p218 = scmp.ne.s32.totalorder %s207, %s208
      %p219 = scmp.eq.s32.totalorder %s21, 0
      %p220 = por %p218, %p219
      %p221 = scmp.ne.s32.totalorder %s207, %s208
      %p222 = scmp.eq.s32.totalorder %s22, 1
      %p223 = por %p221, %p222
      %p225 = scmp.ne.s32.totalorder %s208, %s224
      %p226 = scmp.eq.s32.totalorder %s22, 0
      %p227 = por %p225, %p226
      %p228 = scmp.le.s32.totalorder 1, %s16
      %p229 = scmp.lt.s32.totalorder %s16, 3
      %p230 = pnand %p228, %p229
      %p231 = pneg %p230
      // Predicated region
      $region9: #{tpu_custom_call.1} parent=5 // pred_check
        _
      $region10: #{tpu_custom_call.1} parent=5 // pred_check_branch
        %233 = sbr.rel (%p230) target = $region12
      $region11: #{tpu_custom_call.1} parent=5 // pred_region
        %s234 = ssub.s32 %s16, 1
        // Predicated region
        $region13: #{tpu_custom_call.1} parent=11 // pred_check
          %p235 = pneg %p82
        $region14: #{tpu_custom_call.1} parent=11 // pred_check_branch
          %237 = sbr.rel (%p235) target = $region16
        $region15: #{tpu_custom_call.1} parent=11 // pred_region
          %p238 = scmp.lt.s32.totalorder %s26, 0
          %s239 = scalar_select %p238, %s26, 0
          %s240 = smul.addr %s239, 8
          %s241 = scalar_lea.vmem %s1, %s240
        $region16: #{tpu_custom_call.1} parent=11 // pred_fallthru
          _
        // Predicated region
        $region17: #{tpu_custom_call.1} parent=11 // pred_check
          %p242 = pneg %p129
        $region18: #{tpu_custom_call.1} parent=11 // pred_check_branch
          %244 = sbr.rel (%p242) target = $region20
        $region19: #{tpu_custom_call.1} parent=11 // pred_region
          _
        $region20: #{tpu_custom_call.1} parent=11 // pred_fallthru
          _
        // Predicated region
        $region21: #{tpu_custom_call.1} parent=11 // pred_check
          %p245 = pneg %p150
        $region22: #{tpu_custom_call.1} parent=11 // pred_check_branch
          %247 = sbr.rel (%p245) target = $region24
        $region23: #{tpu_custom_call.1} parent=11 // pred_region
          _
        $region24: #{tpu_custom_call.1} parent=11 // pred_fallthru
          _
        // Predicated region
        $region25: #{tpu_custom_call.1} parent=11 // pred_check
          %p248 = pneg %p171
        $region26: #{tpu_custom_call.1} parent=11 // pred_check_branch
          %250 = sbr.rel (%p248) target = $region28
        $region27: #{tpu_custom_call.1} parent=11 // pred_region
          _
        $region28: #{tpu_custom_call.1} parent=11 // pred_fallthru
          _
        // Predicated region
        $region29: #{tpu_custom_call.1} parent=11 // pred_check
          %p251 = pneg %p192
        $region30: #{tpu_custom_call.1} parent=11 // pred_check_branch
          %253 = sbr.rel (%p251) target = $region32
        $region31: #{tpu_custom_call.1} parent=11 // pred_region
          _
        $region32: #{tpu_custom_call.1} parent=11 // pred_fallthru
          _
      $region12: #{tpu_custom_call.1} parent=5 // pred_fallthru
        _
      %p254 = scmp.lt.s32.totalorder %s16, 2
      // Predicated region
      $region33: #{tpu_custom_call.1} parent=5 // pred_check
        %p255 = pneg %p254
      $region34: #{tpu_custom_call.1} parent=5 // pred_check_branch
        %257 = sbr.rel (%p255) target = $region36
      $region35: #{tpu_custom_call.1} parent=5 // pred_region
        // Predicated region
        $region37: #{tpu_custom_call.1} parent=35 // pred_check
          %p258 = pneg %p50
        $region38: #{tpu_custom_call.1} parent=35 // pred_check_branch
          %260 = sbr.rel (%p258) target = $region40
        $region39: #{tpu_custom_call.1} parent=35 // pred_region
          %p261 = scmp.lt.s32.totalorder %s23, 1
          %s262 = scalar_select %p261, %s23, 1
          %p263 = scmp.lt.s32.totalorder %s24, 0
          %s264 = scalar_select %p263, %s24, 0
          %s265 = sadd.s32 %s264, %s262
          %s266 = smul.addr %s265, 8
          %s267 = scalar_lea.vmem %s0, %s266
        $region40: #{tpu_custom_call.1} parent=35 // pred_fallthru
          _
        // Predicated region
        $region41: #{tpu_custom_call.1} parent=35 // pred_check
          %p268 = pneg %p102
        $region42: #{tpu_custom_call.1} parent=35 // pred_check_branch
          %270 = sbr.rel (%p268) target = $region44
        $region43: #{tpu_custom_call.1} parent=35 // pred_region
          %p271 = scmp.lt.s32.totalorder %s23, 1
          %s272 = scalar_select %p271, %s23, 1
          %s273 = smul.addr %s272, 4
          %s274 = scalar_lea.vmem %s2, %s273
        $region44: #{tpu_custom_call.1} parent=35 // pred_fallthru
          _
      $region36: #{tpu_custom_call.1} parent=5 // pred_fallthru
        _
      %p275 = scmp.le.s32.totalorder 1, %s16
      %p276 = scmp.lt.s32.totalorder %s16, 3
      %p277 = pnand %p275, %p276
      %p278 = pneg %p277
      // Predicated region
      $region45: #{tpu_custom_call.1} parent=5 // pred_check
        _
      $region46: #{tpu_custom_call.1} parent=5 // pred_check_branch
        %280 = sbr.rel (%p277) target = $region48
      $region47: #{tpu_custom_call.1} parent=5 // pred_region
        %s281 = ssub.s32 %s16, 1
        %p282 = scmp.lt.s32.totalorder %s25, 1
        %s283 = scalar_select %p282, %s25, 1
        %p284 = scmp.lt.s32.totalorder %s26, 0
        %s285 = scalar_select %p284, %s26, 0
        %s286 = sadd.s32 %s285, %s283
        %s287 = smul.addr %s286, 8
        %s288 = scalar_lea.vmem %s0, %s287
        %p289 = pneg %p56
        %p290 = pneg %p53
        %p291 = scmp.lt.s32.totalorder %s26, 0
        %s292 = scalar_select %p291, %s26, 0
        %s293 = smul.addr %s292, 8
        %s294 = scalar_lea.vmem %s1, %s293
        %p295 = pneg %p82
        %p296 = pneg %p79
        %p297 = scmp.lt.s32.totalorder %s25, 1
        %s298 = scalar_select %p297, %s25, 1
        %s299 = smul.addr %s298, 4
        %s300 = scalar_lea.vmem %s2, %s299
        %p301 = pneg %p108
        %p302 = pneg %p105
        %p303 = pneg %p129
        %p304 = pneg %p126
        %p305 = pneg %p150
        %p306 = pneg %p147
        %p307 = pneg %p171
        %p308 = pneg %p168
        %p309 = pneg %p192
        %p310 = pneg %p189
        %p311 = pneg %p220
        %p312 = pneg %p217
        %s313 = sand.u32 %s207, 1
        %s314 = scalar_lea.sflag [#allocation3], %s313
        %s315 = sand.u32 %s207, 1
        %s316 = smul.addr %s315, 8
        %s317 = scalar_lea.vmem [#allocation2], %s316
        %p318 = scmp.lt.s32.totalorder %s25, 1
        %s319 = scalar_select %p318, %s25, 1
        %p320 = scmp.lt.s32.totalorder %s26, 0
        %s321 = scalar_select %p320, %s26, 0
        %s322 = sadd.s32 %s321, %s319
        %s323 = smul.addr %s322, 8
        %s324 = scalar_lea.vmem %s0, %s323
        %p325 = scmp.lt.s32.totalorder %s26, 0
        %s326 = scalar_select %p325, %s26, 0
        %s327 = smul.addr %s326, 8
        %s328 = scalar_lea.vmem %s1, %s327
        %p329 = scmp.lt.s32.totalorder %s25, 1
        %s330 = scalar_select %p329, %s25, 1
        %s331 = smul.addr %s330, 4
        %s332 = scalar_lea.vmem %s2, %s331
        %v333 = vld [vmem:[%s324] sm:$0xff]
        %v334 = vld [vmem:[%s328] sm:$0xff]
        %v335 = vld [vmem:[%s332] sm:$0xf]
        %vm336 = vcmask 31744
        %v338 = vsel %vm336, %v334, 0
        %vm340 = vcmask 1043456
        %v342 = vsel %vm340, %v335, 0
        %344 = vmatprep.subr.mxu0 0.0
        %345 = vmatpush1.msra.mxu0 0.0
        %346 = vmatprep.subr.mxu0 0.0
        %347 = vmatpush1.msra.mxu0 0.0
        %348 = vmatprep.subr.mxu0 0.0
        %349 = vmatpush1.msra.mxu0 0.0
        %350 = vmatprep.subr.mxu0 0.0
        %351 = vmatpush1.msra.mxu0 0.0
        %352 = vmatprep.subr.mxu0 0.0
        %353 = vmatpush1.msra.mxu0 0.0
        %354 = vmatprep.subr.mxu0 0.0
        %355 = vmatpush1.msra.mxu0 0.0
        %356 = vmatprep.subr.mxu0 0.0
        %357 = vmatpush1.msra.mxu0 0.0
        %358 = vmatprep.subr.mxu0 0.0
        %359 = vmatpush1.msra.mxu0 0.0
        %360 = vmatprep.subr.mxu0 0.0
        %361 = vmatpush1.msra.mxu0 0.0
        %362 = vmatprep.subr.mxu0 0.0
        %363 = vmatpush1.msra.mxu0 0.0
        %364 = vmatprep.subr.mxu0 0.0
        %365 = vmatpush1.msra.mxu0 0.0
        %366 = vmatprep.subr.mxu0 0.0
        %367 = vmatpush1.msra.mxu0 0.0
        %368 = vmatprep.subr.mxu0 0.0
        %369 = vmatpush1.msra.mxu0 0.0
        %370 = vmatprep.subr.mxu0 0.0
        %371 = vmatpush1.msra.mxu0 0.0
        %372 = vmatprep.subr.mxu0 0.0
        %373 = vmatpush1.msra.mxu0 0.0
        %374 = vmatprep.subr.mxu0 0.0
        %375 = vmatpush1.msra.mxu0 %v342
        %376 = vmatprep.subr.mxu0 0.0
        %377 = vmatpush2.msra.mxu0 0.0
        %378 = vmatprep.subr.mxu0 0.0
        %379 = vmatpush2.msra.mxu0 0.0
        %380 = vmatprep.subr.mxu0 0.0
        %381 = vmatpush2.msra.mxu0 0.0
        %382 = vmatprep.subr.mxu0 0.0
        %383 = vmatpush2.msra.mxu0 0.0
        %384 = vmatprep.subr.mxu0 0.0
        %385 = vmatpush2.msra.mxu0 0.0
        %386 = vmatprep.subr.mxu0 0.0
        %387 = vmatpush2.msra.mxu0 0.0
        %388 = vmatprep.subr.mxu0 0.0
        %389 = vmatpush2.msra.mxu0 0.0
        %390 = vmatprep.subr.mxu0 0.0
        %391 = vmatpush2.msra.mxu0 0.0
        %392 = vmatprep.subr.mxu0 0.0
        %393 = vmatpush2.msra.mxu0 0.0
        %394 = vmatprep.subr.mxu0 0.0
        %395 = vmatpush2.msra.mxu0 0.0
        %396 = vmatprep.subr.mxu0 0.0
        %397 = vmatpush2.msra.mxu0 0.0
        %398 = vmatprep.subr.mxu0 0.0
        %399 = vmatpush2.msra.mxu0 0.0
        %400 = vmatprep.subr.mxu0 0.0
        %401 = vmatpush2.msra.mxu0 0.0
        %402 = vmatprep.subr.mxu0 0.0
        %403 = vmatpush2.msra.mxu0 0.0
        %404 = vmatprep.subr.mxu0 0.0
        %405 = vmatpush2.msra.mxu0 0.0
        %406 = vmatprep.subr.mxu0 0.0
        %407 = vmatpush2.msra.mxu0 0.0
        %408 = vmatprep.mubr.f32.mxu0 0.0
        %409 = vmatmul.mubr.f32.gmra.mxu0 %v338
        %v410 = vpop.f32.mrf.mxu0
        %v411 = vadd.f32 0.0, %v410
        %v412 = vpop.f32.mrf.mxu0
        %413 = vdwg.mxu0
        %v414 = vld [vmem:[%s6] sm:$0x1]
        %v415 = vld [vmem:[%s6 + $0x1] sm:$0x1]
        %v416 = vld [vmem:[%s6 + $0x2] sm:$0x1]
        %v417 = vld [vmem:[%s6 + $0x3] sm:$0x1]
        %v418 = vld [vmem:[%s6 + $0x4] sm:$0x1]
        %v419 = vadd.f32 %v333, %v411
        %vm420 = vcmask 261120
        %v421 = vsel %vm420, %v419, 0.0
        %422 = vadd.xlane.f32.xlu0 %v421
        %v423 = vpop.xlane.xlu0 %422
        %v424 = vrcp.pop 32.0
        %v425 = vmul.f32 %v423, %v424
        %v426 = vsub.f32 %v419, %v425
        %v427 = vmul.f32 %v426, %v426
        %v428 = vsel %vm420, %v427, 0.0
        %429 = vadd.xlane.f32.xlu0 %v428
        %v430 = vpop.xlane.xlu0 %429
        %v431 = vmul.f32 %v430, %v424
        %v432 = vadd.f32 %v431, 1e-05
        %v433 = vrsqrt.pop %v432
        %v434 = vmul.f32 %v426, %v433
        %v435 = vlaneseq
        %v436 = vshrl.u32 %v435, 7
        %v437 = vsub.s32 0, %v436
        %v438 = vrot.slane %v414, %v437
        %v439 = vmul.f32 %v434, %v438
        %v440 = vlaneseq
        %v441 = vshrl.u32 %v440, 7
        %v442 = vsub.s32 0, %v441
        %v443 = vrot.slane %v415, %v442
        %v444 = vadd.f32 %v439, %v443
        %v445 = vld [vmem:[%s3] sm:$0xff]
        %v446 = vld [vmem:[%s3 + $0x8] sm:$0xff]
        %v447 = vld [vmem:[%s3 + $0x10] sm:$0xff]
        %v448 = vld [vmem:[%s3 + $0x18] sm:$0xff]
        %v449 = vld [vmem:[%s4] sm:$0x1]
        %v451 = vlaneseq
        %v452 = vshrl.u32 %v451, 7
        %v453 = vsub.s32 0, %v452
        %v454 = vrot.slane %v449, %v453
        %v457 = vsel %vm420, %v444, 0
        %459 = vmatprep.subr.mxu0 0.0
        %460 = vmatpush1.msra.mxu0 0.0
        %461 = vmatprep.subr.mxu0 0.0
        %462 = vmatpush1.msra.mxu0 0.0
        %463 = vmatprep.subr.mxu0 0.0
        %464 = vmatpush1.msra.mxu0 0.0
        %465 = vmatprep.subr.mxu0 0.0
        %466 = vmatpush1.msra.mxu0 0.0
        %467 = vmatprep.subr.mxu0 0.0
        %468 = vmatpush1.msra.mxu0 0.0
        %469 = vmatprep.subr.mxu0 0.0
        %470 = vmatpush1.msra.mxu0 0.0
        %471 = vmatprep.subr.mxu0 0.0
        %472 = vmatpush1.msra.mxu0 0.0
        %473 = vmatprep.subr.mxu0 0.0
        %474 = vmatpush1.msra.mxu0 0.0
        %475 = vmatprep.subr.mxu0 0.0
        %476 = vmatpush1.msra.mxu0 0.0
        %477 = vmatprep.subr.mxu0 0.0
        %478 = vmatpush1.msra.mxu0 0.0
        %479 = vmatprep.subr.mxu0 0.0
        %480 = vmatpush1.msra.mxu0 0.0
        %481 = vmatprep.subr.mxu0 0.0
        %482 = vmatpush1.msra.mxu0 0.0
        %483 = vmatprep.subr.mxu0 0.0
        %484 = vmatpush1.msra.mxu0 %v448
        %485 = vmatprep.subr.mxu0 0.0
        %486 = vmatpush1.msra.mxu0 %v447
        %487 = vmatprep.subr.mxu0 0.0
        %488 = vmatpush1.msra.mxu0 %v446
        %489 = vmatprep.subr.mxu0 0.0
        %490 = vmatpush1.msra.mxu0 %v445
        %491 = vmatprep.subr.mxu0 0.0
        %492 = vmatpush2.msra.mxu0 0.0
        %493 = vmatprep.subr.mxu0 0.0
        %494 = vmatpush2.msra.mxu0 0.0
        %495 = vmatprep.subr.mxu0 0.0
        %496 = vmatpush2.msra.mxu0 0.0
        %497 = vmatprep.subr.mxu0 0.0
        %498 = vmatpush2.msra.mxu0 0.0
        %499 = vmatprep.subr.mxu0 0.0
        %500 = vmatpush2.msra.mxu0 0.0
        %501 = vmatprep.subr.mxu0 0.0
        %502 = vmatpush2.msra.mxu0 0.0
        %503 = vmatprep.subr.mxu0 0.0
        %504 = vmatpush2.msra.mxu0 0.0
        %505 = vmatprep.subr.mxu0 0.0
        %506 = vmatpush2.msra.mxu0 0.0
        %507 = vmatprep.subr.mxu0 0.0
        %508 = vmatpush2.msra.mxu0 0.0
        %509 = vmatprep.subr.mxu0 0.0
        %510 = vmatpush2.msra.mxu0 0.0
        %511 = vmatprep.subr.mxu0 0.0
        %512 = vmatpush2.msra.mxu0 0.0
        %513 = vmatprep.subr.mxu0 0.0
        %514 = vmatpush2.msra.mxu0 0.0
        %515 = vmatprep.subr.mxu0 0.0
        %516 = vmatpush2.msra.mxu0 0.0
        %517 = vmatprep.subr.mxu0 0.0
        %518 = vmatpush2.msra.mxu0 0.0
        %519 = vmatprep.subr.mxu0 0.0
        %520 = vmatpush2.msra.mxu0 0.0
        %521 = vmatprep.subr.mxu0 0.0
        %522 = vmatpush2.msra.mxu0 0.0
        %523 = vmatprep.mubr.f32.mxu0 0.0
        %524 = vmatmul.mubr.f32.gmra.mxu0 %v457
        %v525 = vpop.f32.mrf.mxu0
        %v526 = vadd.f32 %v454, %v525
        %v527 = vpop.f32.mrf.mxu0
        %528 = vdwg.mxu0
        %v529 = vmax.f32 %v526, 0.0
        %v530 = vld [vmem:[%s5] sm:$0xff]
        %v531 = vld [vmem:[%s5 + $0x8] sm:$0xff]
        %v532 = vld [vmem:[%s5 + $0x10] sm:$0xff]
        %v533 = vld [vmem:[%s5 + $0x18] sm:$0xff]
        %v534 = vld [vmem:[%s5 + $0x20] sm:$0xff]
        %v535 = vld [vmem:[%s5 + $0x28] sm:$0xff]
        %v536 = vld [vmem:[%s5 + $0x30] sm:$0xff]
        %v537 = vld [vmem:[%s5 + $0x38] sm:$0xff]
        %v538 = vld [vmem:[%s5 + $0x40] sm:$0xff]
        %v539 = vld [vmem:[%s5 + $0x48] sm:$0xff]
        %v540 = vld [vmem:[%s5 + $0x50] sm:$0xff]
        %v541 = vld [vmem:[%s5 + $0x58] sm:$0xff]
        %v542 = vld [vmem:[%s5 + $0x60] sm:$0xff]
        %v543 = vld [vmem:[%s5 + $0x68] sm:$0xff]
        %v544 = vld [vmem:[%s5 + $0x70] sm:$0xff]
        %v545 = vld [vmem:[%s5 + $0x78] sm:$0xff]
        %v546 = vlaneseq
        %v547 = vshrl.u32 %v546, 7
        %v548 = vsub.s32 0, %v547
        %v549 = vrot.slane %v418, %v548
        %550 = vmatprep.subr.mxu0 0.0
        %551 = vmatpush1.msra.mxu0 %v545
        %552 = vmatprep.subr.mxu0 0.0
        %553 = vmatpush1.msra.mxu0 %v544
        %554 = vmatprep.subr.mxu0 0.0
        %555 = vmatpush1.msra.mxu0 %v543
        %556 = vmatprep.subr.mxu0 0.0
        %557 = vmatpush1.msra.mxu0 %v542
        %558 = vmatprep.subr.mxu0 0.0
        %559 = vmatpush1.msra.mxu0 %v541
        %560 = vmatprep.subr.mxu0 0.0
        %561 = vmatpush1.msra.mxu0 %v540
        %562 = vmatprep.subr.mxu0 0.0
        %563 = vmatpush1.msra.mxu0 %v539
        %564 = vmatprep.subr.mxu0 0.0
        %565 = vmatpush1.msra.mxu0 %v538
        %566 = vmatprep.subr.mxu0 0.0
        %567 = vmatpush1.msra.mxu0 %v537
        %568 = vmatprep.subr.mxu0 0.0
        %569 = vmatpush1.msra.mxu0 %v536
        %570 = vmatprep.subr.mxu0 0.0
        %571 = vmatpush1.msra.mxu0 %v535
        %572 = vmatprep.subr.mxu0 0.0
        %573 = vmatpush1.msra.mxu0 %v534
        %574 = vmatprep.subr.mxu0 0.0
        %575 = vmatpush1.msra.mxu0 %v533
        %576 = vmatprep.subr.mxu0 0.0
        %577 = vmatpush1.msra.mxu0 %v532
        %578 = vmatprep.subr.mxu0 0.0
        %579 = vmatpush1.msra.mxu0 %v531
        %580 = vmatprep.subr.mxu0 0.0
        %581 = vmatpush1.msra.mxu0 %v530
        %582 = vmatprep.subr.mxu0 0.0
        %583 = vmatpush2.msra.mxu0 0.0
        %584 = vmatprep.subr.mxu0 0.0
        %585 = vmatpush2.msra.mxu0 0.0
        %586 = vmatprep.subr.mxu0 0.0
        %587 = vmatpush2.msra.mxu0 0.0
        %588 = vmatprep.subr.mxu0 0.0
        %589 = vmatpush2.msra.mxu0 0.0
        %590 = vmatprep.subr.mxu0 0.0
        %591 = vmatpush2.msra.mxu0 0.0
        %592 = vmatprep.subr.mxu0 0.0
        %593 = vmatpush2.msra.mxu0 0.0
        %594 = vmatprep.subr.mxu0 0.0
        %595 = vmatpush2.msra.mxu0 0.0
        %596 = vmatprep.subr.mxu0 0.0
        %597 = vmatpush2.msra.mxu0 0.0
        %598 = vmatprep.subr.mxu0 0.0
        %599 = vmatpush2.msra.mxu0 0.0
        %600 = vmatprep.subr.mxu0 0.0
        %601 = vmatpush2.msra.mxu0 0.0
        %602 = vmatprep.subr.mxu0 0.0
        %603 = vmatpush2.msra.mxu0 0.0
        %604 = vmatprep.subr.mxu0 0.0
        %605 = vmatpush2.msra.mxu0 0.0
        %606 = vmatprep.subr.mxu0 0.0
        %607 = vmatpush2.msra.mxu0 0.0
        %608 = vmatprep.subr.mxu0 0.0
        %609 = vmatpush2.msra.mxu0 0.0
        %610 = vmatprep.subr.mxu0 0.0
        %611 = vmatpush2.msra.mxu0 0.0
        %612 = vmatprep.subr.mxu0 0.0
        %613 = vmatpush2.msra.mxu0 0.0
        %614 = vmatprep.mubr.f32.mxu0 0.0
        %615 = vmatmul.mubr.f32.gmra.mxu0 %v529
        %v616 = vpop.f32.mrf.mxu0
        %v617 = vadd.f32 %v549, %v616
        %v618 = vpop.f32.mrf.mxu0
        %619 = vdwg.mxu0
        %v620 = vadd.f32 %v444, %v617
        %v621 = vsel %vm420, %v620, 0.0
        %622 = vadd.xlane.f32.xlu0 %v621
        %v623 = vpop.xlane.xlu0 %622
        %v624 = vmul.f32 %v623, %v424
        %v625 = vsub.f32 %v620, %v624
        %v626 = vmul.f32 %v625, %v625
        %v627 = vsel %vm420, %v626, 0.0
        %628 = vadd.xlane.f32.xlu0 %v627
        %v629 = vpop.xlane.xlu0 %628
        %v630 = vmul.f32 %v629, %v424
        %v631 = vadd.f32 %v630, 1e-05
        %v632 = vrsqrt.pop %v631
        %v633 = vmul.f32 %v625, %v632
        %v634 = vlaneseq
        %v635 = vshrl.u32 %v634, 7
        %v636 = vsub.s32 0, %v635
        %v637 = vrot.slane %v416, %v636
        %v638 = vmul.f32 %v633, %v637
        %v639 = vlaneseq
        %v640 = vshrl.u32 %v639, 7
        %v641 = vsub.s32 0, %v640
        %v642 = vrot.slane %v417, %v641
        %v643 = vadd.f32 %v638, %v642
        %644 = vst.msk [vmem:[%s317] sm:$0xff] %vm420, %v643
        %s645 = sand.u32 %s207, 1
        %s646 = scalar_lea.sflag [#allocation3], %s645
        %s647 = sand.u32 %s207, 1
        %s648 = smul.addr %s647, 8
        %s649 = scalar_lea.vmem [#allocation2], %s648
        // Predicated region
        $region49: #{tpu_custom_call.1} parent=47 // pred_check
          %p650 = pneg %p217
        $region50: #{tpu_custom_call.1} parent=47 // pred_check_branch
          %652 = sbr.rel (%p650) target = $region52
        $region51: #{tpu_custom_call.1} parent=47 // pred_region
          %s654 = ssub.s32 128, 128
          %655 = vsyncadd %s646, %s654
          %s656 = sadd.s32 %s26, %s25
          %s657 = smul.addr %s656, 128
          %s658 = scalar_lea.hbm %s7, %s657
          %s660 = sshll.u32 %s649, 4
          %s661 = int_to_ptr.vmem [resolvable:$true] %s660
          %663 = dma.vmem_to_hbm [thread:$0]  %s661, 128, %s658, %s646
        $region52: #{tpu_custom_call.1} parent=47 // pred_fallthru
          _
      $region48: #{tpu_custom_call.1} parent=5 // pred_fallthru
        _
      %p664 = scmp.le.s32.totalorder 2, %s16
      // Predicated region
      $region53: #{tpu_custom_call.1} parent=5 // pred_check
        %p665 = pneg %p664
      $region54: #{tpu_custom_call.1} parent=5 // pred_check_branch
        %667 = sbr.rel (%p665) target = $region56
      $region55: #{tpu_custom_call.1} parent=5 // pred_region
        %s668 = ssub.s32 %s16, 2
        // Predicated region
        $region57: #{tpu_custom_call.1} parent=55 // pred_check
          %p669 = pneg %p223
        $region58: #{tpu_custom_call.1} parent=55 // pred_check_branch
          %671 = sbr.rel (%p669) target = $region60
        $region59: #{tpu_custom_call.1} parent=55 // pred_region
          %s672 = sand.u32 %s208, 1
          %s673 = scalar_lea.sflag [#allocation3], %s672
          %s674 = sand.u32 %s208, 1
          %s675 = smul.addr %s674, 8
          %s676 = scalar_lea.vmem [#allocation2], %s675
          %677 = dma.done %s673, 128
        $region60: #{tpu_custom_call.1} parent=55 // pred_fallthru
          _
      $region56: #{tpu_custom_call.1} parent=5 // pred_fallthru
        _
    $region6: #{tpu_custom_call.1} parent=1 // loop_footer
      %s20 = sadd.s32 1, %s16
    $region7: #{tpu_custom_call.1} parent=1 // loop_footer_branch
      %15 = sbr.rel target = $region3
    $region8: #{tpu_custom_call.1} parent=1 // loop_exit
      _
    %678 = vsyncpa [#allocation3], 1
    %s679 = scalar_lea.sflag [#allocation3], 1
    %680 = vsyncpa %s679, 1

</llo_original>
